<compile_context>
chip_gen: v6e
topology: v6e:2x2x1
jax: 0.10.0
libtpu: 0.0.40
codegen_flags: <defaults>
</compile_context>

<pallas_src>
import functools

import jax
import jax.numpy as jnp
from jax.experimental import pallas as pl
from jax.experimental.pallas import tpu as pltpu


_LANE = 128
_SUBLANE = 8
_DEFAULT_VMEM_TILE_BUDGET = 32 * 1024 * 1024   # bytes for pipeline data buffers
_VMEM_LIMIT_BYTES = 48 * 1024 * 1024           # scoped VMEM limit (safe on v7x 64 MiB)
_MAX_TILE_N = 512                              # ~85% of HBM roofline per measured data


def _round_up(x: int, m: int) -> int:
    return (x + m - 1) // m * m


def _choose_tiles(n, g, in_bytes, out_bytes, budget, max_tile_g=None):
    """Pick (tile_n, tile_g): (8,128)-aligned and sized to the VMEM budget."""
    per_elem = 2 * (in_bytes + out_bytes)          # double-buffered input + output
    n_pad8 = _round_up(n, _SUBLANE)
    g_pad = _round_up(g, _LANE)
    tile_g = g_pad if max_tile_g is None else min(g_pad, _round_up(max_tile_g, _LANE))
    # Shrink tile_g until at least 8 rows fit in the budget (large-G case).
    while tile_g > _LANE and per_elem * _SUBLANE * tile_g > budget:
        tile_g = _round_up(tile_g // 2, _LANE)
    # Grow tile_n as far as the budget allows (capped; diminishing returns > 512).
    rows = budget // (per_elem * tile_g)
    tile_n = max(_SUBLANE, min(_MAX_TILE_N, n_pad8, (rows // _SUBLANE) * _SUBLANE))
    return tile_n, tile_g


# ---------------------------------------------------------------------------
# Kernels
# ---------------------------------------------------------------------------

def _fused_normalize_kernel(x_ref, o_ref, *, target_count, eps):
    """(tile_n, G) block: row-sum + scale in a single pass (full G in one block)."""
    x = x_ref[...]
    total = jnp.sum(x.astype(jnp.float32), axis=-1, keepdims=True)      # (tile_n, 1) f32
    scale = target_count * pl.reciprocal(total + eps, approx=True)      # EUP vrcp
    o_ref[...] = x.astype(o_ref.dtype) * scale.astype(o_ref.dtype)


def _rowsum_kernel(x_ref, t_ref):
    """Accumulate per-row sums over the innermost (gene) grid axis."""
    j = pl.program_id(1)

    @pl.when(j == 0)
    def _init():
        t_ref[...] = jnp.zeros_like(t_ref)

    t_ref[...] += jnp.sum(x_ref[...].astype(jnp.float32), axis=-1, keepdims=True)


def _scale_kernel(x_ref, t_ref, o_ref, *, target_count, eps):
    """Scale a (tile_n, tile_g) block by target_count / (total + eps)."""
    total = t_ref[...].astype(jnp.float32)                              # (tile_n, 1)
    scale = target_count * pl.reciprocal(total + eps, approx=True)
    o_ref[...] = x_ref[...].astype(o_ref.dtype) * scale.astype(o_ref.dtype)


# ---------------------------------------------------------------------------
# Wrapper
# ---------------------------------------------------------------------------

def normalize_total(x_ng, total_mrna_umis_n=None, *, target_count=10000, eps=1e-6,
                    vmem_tile_budget_bytes=_DEFAULT_VMEM_TILE_BUDGET, max_tile_g=None):
    """Pallas implementation of NormalizeTotal.forward. Returns {'x_ng': ...}."""
    n, g = x_ng.shape
    out_dtype = x_ng.dtype if jnp.issubdtype(x_ng.dtype, jnp.floating) else jnp.float32
    in_bytes = jnp.dtype(x_ng.dtype).itemsize
    out_bytes = jnp.dtype(out_dtype).itemsize

    tile_n, tile_g = _choose_tiles(n, g, in_bytes, out_bytes,
                                   vmem_tile_budget_bytes, max_tile_g)
    n_pad = _round_up(n, tile_n)
    g_pad = _round_up(g, tile_g)
    grid_n = n_pad // tile_n
    grid_g = g_pad // tile_g

    xp = x_ng
    if (n_pad, g_pad) != (n, g):
        xp = jnp.pad(x_ng, ((0, n_pad - n), (0, g_pad - g)))

    target_count = float(target_count)
    eps = float(eps)

    x_spec = pl.BlockSpec((tile_n, tile_g), lambda i, j: (i, j))
    t_spec = pl.BlockSpec((tile_n, 1), lambda i, j: (i, 0))
    out_spec = pl.BlockSpec((tile_n, tile_g), lambda i, j: (i, j))

    if total_mrna_umis_n is None and grid_g == 1:
        # Single fused pass: totals computed in-kernel (XLU reduce is free slack
        # relative to the mem-bound DMA/VPU path).
        y = pl.pallas_call(
            functools.partial(_fused_normalize_kernel,
                              target_count=target_count, eps=eps),
            out_shape=jax.ShapeDtypeStruct((n_pad, g_pad), out_dtype),
            grid=(grid_n,),
            in_specs=[pl.BlockSpec((tile_n, tile_g), lambda i: (i, 0))],
            out_specs=pl.BlockSpec((tile_n, tile_g), lambda i: (i, 0)),
            compiler_params=pltpu.CompilerParams(
                dimension_semantics=("parallel",),
                vmem_limit_bytes=_VMEM_LIMIT_BYTES),
        )(xp)
    else:
        if total_mrna_umis_n is None:
            # Pass 1: row-sum reduction over the gene-tiled axis.
            totals = pl.pallas_call(
                _rowsum_kernel,
                out_shape=jax.ShapeDtypeStruct((n_pad, 1), jnp.float32),
                grid=(grid_n, grid_g),
                in_specs=[x_spec],
                out_specs=pl.BlockSpec((tile_n, 1), lambda i, j: (i, 0)),
                compiler_params=pltpu.CompilerParams(
                    dimension_semantics=("parallel", "arbitrary"),
                    vmem_limit_bytes=_VMEM_LIMIT_BYTES),
            )(xp)
        else:
            t = jnp.asarray(total_mrna_umis_n).reshape(n).astype(jnp.float32)
            if n_pad != n:
                t = jnp.pad(t, (0, n_pad - n))
            totals = t.reshape(n_pad, 1)

        # Pass 2: elementwise scale, gene-tiled.
        y = pl.pallas_call(
            functools.partial(_scale_kernel, target_count=target_count, eps=eps),
            out_shape=jax.ShapeDtypeStruct((n_pad, g_pad), out_dtype),
            grid=(grid_n, grid_g),
            in_specs=[x_spec, t_spec],
            out_specs=out_spec,
            compiler_params=pltpu.CompilerParams(
                dimension_semantics=("parallel", "arbitrary"),
                vmem_limit_bytes=_VMEM_LIMIT_BYTES),
        )(xp, totals)

    if (n_pad, g_pad) != (n, g):
        y = y[:n, :g]
    return {"x_ng": y}


if __name__ == "__main__":
    key = jax.random.PRNGKey(0)
    k1, _ = jax.random.split(key)

    # Small, deliberately ragged shapes: N not a multiple of 8, G not of 128.
    n_cells, n_genes = 10, 300
    target_count, eps = 10000, 1e-6

    counts = jax.random.poisson(k1, lam=3.0, shape=(n_cells, n_genes))  # int32 UMIs
    x_f32 = counts.astype(jnp.float32)

    ref = target_count * x_f32 / (x_f32.sum(axis=-1, keepdims=True) + eps)

    # 1) totals computed in-kernel (fused single pass).
    y1 = jax.block_until_ready(
        normalize_total(x_f32, target_count=target_count, eps=eps)["x_ng"])
    assert y1.shape == (n_cells, n_genes) and y1.dtype == jnp.float32
    assert jnp.allclose(y1, ref, rtol=5e-3, atol=1e-2), "mismatch (fused path)"

    # 2) totals provided.
    totals = x_f32.sum(axis=-1)
    y2 = jax.block_until_ready(
        normalize_total(x_f32, totals, target_count=target_count, eps=eps)["x_ng"])
    assert jnp.allclose(y2, ref, rtol=5e-3, atol=1e-2), "mismatch (given totals)"

    # 3) force gene tiling (exercises the two-pass row-sum + scale path).
    y3 = jax.block_until_ready(
        normalize_total(x_f32, target_count=target_count, eps=eps,
                        max_tile_g=128)["x_ng"])
    assert jnp.allclose(y3, ref, rtol=5e-3, atol=1e-2), "mismatch (two-pass path)"

    # 4) integer UMI counts -> float32 output (no silent truncation).
    y4 = jax.block_until_ready(
        normalize_total(counts, target_count=target_count, eps=eps)["x_ng"])
    assert y4.dtype == jnp.float32
    assert jnp.allclose(y4, ref, rtol=5e-3, atol=1e-2), "mismatch (int input)"

    # 5) bfloat16 input stays bfloat16 (multiply in bf16, row-sum in f32).
    x_bf16 = x_f32.astype(jnp.bfloat16)
    y5 = jax.block_until_ready(
        normalize_total(x_bf16, target_count=target_count, eps=eps)["x_ng"])
    assert y5.dtype == jnp.bfloat16
    assert jnp.allclose(y5.astype(jnp.float32), ref, rtol=5e-2, atol=0.5), \
        "mismatch (bf16 path)"

    print("KERNEL_OK")
</pallas_src>

<mosaic_0001>
module attributes {stable_mosaic.version = 11 : i64} {
  func.func @_fused_normalize_kernel(%arg0: i32, %arg1: memref<16x384xf32, #tpu.memory_space<vmem>>, %arg2: memref<16x384xf32, #tpu.memory_space<vmem>>) attributes {dimension_semantics = [#tpu.dimension_semantics<parallel>], iteration_bounds = array<i64: 1>, scalar_prefetch = 0 : i64, scratch_operands = 0 : i64, tpu.core_type = #tpu.core_type<tc>, window_params = [{transform_indices = @transform_0, window_bounds = array<i64: 16, 384>}, {transform_indices = @transform_1, window_bounds = array<i64: 16, 384>}]} {
    %c0 = arith.constant 0 : index
    %c0_0 = arith.constant 0 : index
    %0 = vector.load %arg1[%c0, %c0_0] : memref<16x384xf32, #tpu.memory_space<vmem>>, vector<16x384xf32>
    %cst = arith.constant dense<0.000000e+00> : vector<16xf32>
    %1 = vector.multi_reduction <add>, %0, %cst [1] : vector<16x384xf32> to vector<16xf32>
    %2 = vector.shape_cast %1 : vector<16xf32> to vector<16x1xf32>
    %cst_1 = arith.constant 9.99999997E-7 : f32
    %3 = vector.broadcast %cst_1 : f32 to vector<16x1xf32>
    %4 = arith.addf %2, %3 : vector<16x1xf32>
    %5 = tpu.reciprocal %4 {approx = true} : vector<16x1xf32> -> vector<16x1xf32>
    %cst_2 = arith.constant 1.000000e+04 : f32
    %6 = vector.broadcast %cst_2 : f32 to vector<16x1xf32>
    %7 = arith.mulf %6, %5 : vector<16x1xf32>
    %8 = vector.broadcast %7 : vector<16x1xf32> to vector<16x384xf32>
    %9 = arith.mulf %0, %8 : vector<16x384xf32>
    %c0_3 = arith.constant 0 : index
    %c0_4 = arith.constant 0 : index
    %10 = vector.load %arg2[%c0_3, %c0_4] : memref<16x384xf32, #tpu.memory_space<vmem>>, vector<16x384xf32>
    tpu.vector_store %arg2[%c0_3, %c0_4], %9 {strides = array<i32>} : memref<16x384xf32, #tpu.memory_space<vmem>>, vector<16x384xf32>,
    return
  }
  func.func @transform_0(%arg0: i32) -> (i32, i32) {
    %c0_i32 = arith.constant 0 : i32
    %c0_i32_0 = arith.constant 0 : i32
    return %arg0, %c0_i32 : i32, i32
  }
  func.func @transform_1(%arg0: i32) -> (i32, i32) {
    %c0_i32 = arith.constant 0 : i32
    %c0_i32_0 = arith.constant 0 : i32
    return %arg0, %c0_i32 : i32, i32
  }
}

</mosaic_0001>

<llo_original>
// kernel: tpu_custom_call.1
$region0: #{tpu_custom_call.1}
  #allocation0 [shape = 'u32[]', space=smem, size = 0x4, offset = 0x4, fixed_abs, tag = 'smem constant byte address 0x4 - core index']
  #allocation1 [shape = 'u32[144,128]{1,0:T(1,128)}', space=vmem, size = 0x12000, scoped, tag = 'internal scratch']
  %s0 = inlined_call_operand.hbm [shape: f32[16,384], index: 0, kind: input, shape index: {}]
  %s1 = inlined_call_operand.hbm [shape: f32[16,384], index: 1, kind: output, shape index: {}]
  %s2 = sld [smem:[#allocation0]]
  $region18: #{tpu_custom_call.1} parent=0
    _
  %s4 = ssub.s32 1, %s2
  %s5 = scalar_select 0, %s4, %s2
  $region1: #{tpu_custom_call.1} parent=0
    #allocation2 [shape = 'u8[24576]{0}', space=vmem, size = 0x6000, scoped, tag = 'input window, operand 0, single buffered']
    #allocation3 [shape = 's32[1]{0}', space=sflag, size = 0x4, scoped, tag = 'scoped memory for tpu_custom_call.1']
    #allocation4 [shape = 's32[1]{0}', space=sflag, size = 0x4, scoped, tag = 'scoped memory for tpu_custom_call.1']
    #allocation5 [shape = 'u8[24576]{0}', space=vmem, size = 0x6000, scoped, tag = 'output window, operand 0, single buffered']
    %6 = vsyncpa [#allocation3], 0
    %7 = vsyncpa [#allocation4], 0
    // Predicated region
    $region2: #{tpu_custom_call.1} parent=1 // pred_check
      _
    $region3: #{tpu_custom_call.1} parent=1 // pred_check_branch
      %9 = sbr.rel (0) target = $region5
    $region4: #{tpu_custom_call.1} parent=1 // pred_region
      %s11 = ssub.s32 768, 768
      %12 = vsyncadd [#allocation3], %s11
      %s13 = sshll.u32 [#allocation2], 4
      %s14 = int_to_ptr.vmem [resolvable:$true] %s13
      %19 = dma.hbm_to_vmem [thread:$0]  %s0, 768, %s14, [#allocation3], 384, 384, 24
    $region5: #{tpu_custom_call.1} parent=1 // pred_fallthru
      _
    // Predicated region
    $region6: #{tpu_custom_call.1} parent=1 // pred_check
      _
    $region7: #{tpu_custom_call.1} parent=1 // pred_check_branch
      %21 = sbr.rel (0) target = $region9
    $region8: #{tpu_custom_call.1} parent=1 // pred_region
      %22 = dma.done [#allocation3], 768
    $region9: #{tpu_custom_call.1} parent=1 // pred_fallthru
      _
    %v23 = vld [vmem:[#allocation2] sm:$0xff]
    %v24 = vld [vmem:[#allocation2 + $0x8] sm:$0xff]
    %v25 = vld [vmem:[#allocation2 + $0x10] sm:$0xff]
    %v26 = vld [vmem:[#allocation2 + $0x18] sm:$0xff]
    %v27 = vld [vmem:[#allocation2 + $0x20] sm:$0xff]
    %v28 = vld [vmem:[#allocation2 + $0x28] sm:$0xff]
    %v29 = vadd.f32 %v23, %v24
    %v30 = vadd.f32 %v29, %v25
    %31 = vadd.xlane.f32.xlu0 %v30
    %v32 = vpop.xlane.xlu0 %31
    %v33 = vadd.f32 %v26, %v27
    %v34 = vadd.f32 %v33, %v28
    %35 = vadd.xlane.f32.xlu0 %v34
    %v36 = vpop.xlane.xlu0 %35
    %v37 = vadd.f32 %v32, 1e-06
    %v38 = vadd.f32 %v36, 1e-06
    %v39 = vrcp.pop %v37
    %v40 = vrcp.pop %v38
    %v41 = vmul.f32 %v39, 10000.0
    %v42 = vmul.f32 %v40, 10000.0
    %v43 = vmul.f32 %v23, %v41
    %v44 = vmul.f32 %v24, %v41
    %v45 = vmul.f32 %v25, %v41
    %v46 = vmul.f32 %v26, %v42
    %v47 = vmul.f32 %v27, %v42
    %v48 = vmul.f32 %v28, %v42
    %49 = vst [vmem:[#allocation5] sm:$0xff] %v43
    %50 = vst [vmem:[#allocation5 + $0x8] sm:$0xff] %v44
    %51 = vst [vmem:[#allocation5 + $0x10] sm:$0xff] %v45
    %52 = vst [vmem:[#allocation5 + $0x18] sm:$0xff] %v46
    %53 = vst [vmem:[#allocation5 + $0x20] sm:$0xff] %v47
    %54 = vst [vmem:[#allocation5 + $0x28] sm:$0xff] %v48
    // Predicated region
    $region10: #{tpu_custom_call.1} parent=1 // pred_check
      _
    $region11: #{tpu_custom_call.1} parent=1 // pred_check_branch
      %56 = sbr.rel (0) target = $region13
    $region12: #{tpu_custom_call.1} parent=1 // pred_region
      %s58 = ssub.s32 768, 768
      %59 = vsyncadd [#allocation4], %s58
      %s60 = sshll.u32 [#allocation5], 4
      %s61 = int_to_ptr.vmem [resolvable:$true] %s60
      %66 = dma.vmem_to_hbm [thread:$0]  %s61, 768, %s1, [#allocation4], 384, 384, 24
    $region13: #{tpu_custom_call.1} parent=1 // pred_fallthru
      _
    // Predicated region
    $region14: #{tpu_custom_call.1} parent=1 // pred_check
      _
    $region15: #{tpu_custom_call.1} parent=1 // pred_check_branch
      %68 = sbr.rel (0) target = $region17
    $region16: #{tpu_custom_call.1} parent=1 // pred_region
      %69 = dma.done [#allocation4], 768
    $region17: #{tpu_custom_call.1} parent=1 // pred_fallthru
      _
    %70 = vsyncpa [#allocation3], 1
    %71 = vsyncpa [#allocation4], 1

</llo_original>
